<compile_context>
chip_gen: v6e
topology: v6e:2x2x1
jax: 0.10.0
libtpu: 0.0.40
codegen_flags: <defaults>
</compile_context>

<pallas_src>
import functools

import jax
import jax.numpy as jnp
from jax.experimental import pallas as pl
from jax.experimental.pallas import tpu as pltpu

_BN_EPS = 1e-5


def _resnet_block_kernel(x_ref, wt1_ref, g1_ref, b1_ref, wt2_ref, g2_ref,
                         b2_ref, cavg_ref, out_ref, *, n, h, w, c):
    """Fused pad->conv->BN->ReLU->pad->conv->BN->(+x), lane-dense (W*C lanes)."""
    wc = w * c
    cavg = cavg_ref[...]                       # (wc, wc): [same channel]/(N*H*W)
    zeros6 = jnp.zeros((6, wc), jnp.float32)   # sublane pad for the stats matmul

    def conv3x3(a, wt_ref):
        # a: (n, h, wc) f32.  Width reflection is folded into the Toeplitz
        # weight, so only the HEIGHT reflection is done here (row concat).
        top = a[:, 1:2, :]                     # row i = 1
        bot = a[:, h - 2:h - 1, :]             # row i = h - 2
        ap = jnp.concatenate([top, a, bot], axis=1)            # (n, h+2, wc)
        # Rows i-1, i, i+1 concatenated on lanes: (n, h, 3*wc); 3*wc % 128 == 0
        rows = jnp.concatenate(
            [ap[:, 0:h, :], ap[:, 1:h + 1, :], ap[:, 2:h + 2, :]], axis=-1)
        patches = rows.reshape(n * h, 3 * wc).astype(jnp.bfloat16)
        # Single bf16 MXU matmul with f32 accumulation -> (n*h, wc) lane-dense.
        return jnp.dot(patches, wt_ref[...],
                       preferred_element_type=jnp.float32)

    def batchnorm(y, g_ref, b_ref, relu):
        # Training-mode BN with global (whole-batch) biased statistics,
        # computed in a single pass: one stats matmul reduces sum(y) and
        # sum(y*y) to per-channel values broadcast over every lane.
        s1 = jnp.sum(y, axis=0, keepdims=True)             # (1, wc)
        s2 = jnp.sum(y * y, axis=0, keepdims=True)         # (1, wc)
        stats = jnp.concatenate([s1, s2, zeros6], axis=0)  # (8, wc)
        red = jnp.dot(stats, cavg, preferred_element_type=jnp.float32)
        mean = red[0:1, :]
        var = red[1:2, :] - mean * mean                    # E[y^2] - E[y]^2
        inv = jax.lax.rsqrt(var + _BN_EPS)
        scale = inv * g_ref[...]                           # BN folded to one FMA
        shift = b_ref[...] - mean * scale
        out = y * scale + shift
        return jnp.maximum(out, 0.0) if relu else out

    x = x_ref[...].astype(jnp.float32)                     # (n, h, wc)
    h1 = batchnorm(conv3x3(x, wt1_ref), g1_ref, b1_ref, relu=True)
    y2 = batchnorm(conv3x3(h1.reshape(n, h, wc), wt2_ref), g2_ref, b2_ref,
                   relu=False)
    out_ref[...] = (y2 + x.reshape(n * h, wc)).astype(out_ref.dtype)


def _toeplitz_weight(w_hwio, width, c):
    """HWIO (3,3,Cin,Cout) conv weight -> (3*width*c, width*c) matrix that
    performs the width-direction im2col with the REFLECT padding folded in
    (source column -1 -> 1, column `width` -> width-2), so the matmul K is
    3*W*C and the kernel needs no width padding at all."""
    dj = jnp.arange(3)                                        # kernel col offset
    j = jnp.arange(width)                                     # output column
    src = j[None, :] + dj[:, None] - 1                        # (3, width)
    src = jnp.where(src < 0, -src, src)                       # reflect left edge
    src = jnp.where(src >= width, 2 * (width - 1) - src, src) # reflect right edge
    p = jnp.arange(width)                                     # source column
    sel = (p[None, :, None] == src[:, None, :]).astype(w_hwio.dtype)  # (3,W,W)
    t = jnp.einsum('deio,epj->dpijo', w_hwio, sel)            # (3,W,Cin,W,Cout)
    return t.reshape(3 * width * c, width * c)


def resnet_block_forward(x_nchw, params):
    """out = x + conv_block(x); conv_block = [ReflectPad, Conv3x3(no bias), BN,
    ReLU, ReflectPad, Conv3x3(no bias), BN]."""
    n, c, h, w = x_nchw.shape
    wc = w * c
    f32, bf16 = jnp.float32, jnp.bfloat16

    # Lane-dense activation slab (layout plumbing done in the wrapper).
    x_dense = jnp.transpose(x_nchw, (0, 2, 3, 1)).reshape(n, h, wc)

    # Toeplitz weights built in f32, fed to the MXU as bf16 (f32 accumulation).
    wt1 = _toeplitz_weight(params["w1"].astype(f32), w, c).astype(bf16)
    wt2 = _toeplitz_weight(params["w2"].astype(f32), w, c).astype(bf16)
    g1 = jnp.tile(params["g1"].astype(f32), w).reshape(1, wc)
    b1 = jnp.tile(params["b1"].astype(f32), w).reshape(1, wc)
    g2 = jnp.tile(params["g2"].astype(f32), w).reshape(1, wc)
    b2 = jnp.tile(params["b2"].astype(f32), w).reshape(1, wc)

    # "Same channel" averaging matrix: (sum over lanes with equal channel)/NHW.
    lane = jnp.arange(wc)
    chan_avg = ((lane[:, None] % c) == (lane[None, :] % c)).astype(f32)
    chan_avg = chan_avg / float(n * h * w)

    kernel = functools.partial(_resnet_block_kernel, n=n, h=h, w=w, c=c)
    out = pl.pallas_call(
        kernel,
        out_shape=jax.ShapeDtypeStruct((n * h, wc), x_nchw.dtype),
        in_specs=[pl.BlockSpec(memory_space=pltpu.MemorySpace.VMEM)] * 8,
        out_specs=pl.BlockSpec(memory_space=pltpu.MemorySpace.VMEM),
    )(x_dense, wt1, g1, b1, wt2, g2, b2, chan_avg)

    return jnp.transpose(out.reshape(n, h, w, c), (0, 3, 1, 2))


# ---------------------------------------------------------------------------
# Pure-JAX f32 reference (correctness check for the Pallas kernel)
# ---------------------------------------------------------------------------
def _ref_forward(x_nchw, w1_oihw, g1, b1, w2_oihw, g2, b2):
    def convbn(x, w, g, b, relu):
        xp = jnp.pad(x, ((0, 0), (0, 0), (1, 1), (1, 1)), mode="reflect")
        y = jax.lax.conv_general_dilated(
            xp, w, (1, 1), "VALID",
            dimension_numbers=("NCHW", "OIHW", "NCHW"))
        mean = jnp.mean(y, axis=(0, 2, 3), keepdims=True)
        var = jnp.mean((y - mean) ** 2, axis=(0, 2, 3), keepdims=True)
        y = (y - mean) * jax.lax.rsqrt(var + _BN_EPS)
        y = y * g.reshape(1, -1, 1, 1) + b.reshape(1, -1, 1, 1)
        return jnp.maximum(y, 0.0) if relu else y

    h = convbn(x_nchw, w1_oihw, g1, b1, True)
    y = convbn(h, w2_oihw, g2, b2, False)
    return x_nchw + y


if __name__ == "__main__":
    # Small shapes consistent with the module: dim (channels) = 8, 16x16 maps.
    N, C, H, W = 2, 8, 16, 16

    key = jax.random.PRNGKey(0)
    kx, kw1, kw2, kg1, kb1, kg2, kb2 = jax.random.split(key, 7)

    x = jax.random.normal(kx, (N, C, H, W), jnp.float32)

    # Conv2d weights in PyTorch OIHW layout (dim, dim, 3, 3), no bias.
    w1_oihw = jax.random.normal(kw1, (C, C, 3, 3), jnp.float32) * 0.1
    w2_oihw = jax.random.normal(kw2, (C, C, 3, 3), jnp.float32) * 0.1
    # BatchNorm affine params (deterministic, non-trivial).
    g1 = 1.0 + 0.1 * jax.random.normal(kg1, (C,), jnp.float32)
    b1 = 0.1 * jax.random.normal(kb1, (C,), jnp.float32)
    g2 = 1.0 + 0.1 * jax.random.normal(kg2, (C,), jnp.float32)
    b2 = 0.1 * jax.random.normal(kb2, (C,), jnp.float32)

    params = {
        # kernel wants HWIO: w[kh, kw, c_in, c_out] == W_oihw[c_out, c_in, kh, kw]
        "w1": jnp.transpose(w1_oihw, (2, 3, 1, 0)),
        "w2": jnp.transpose(w2_oihw, (2, 3, 1, 0)),
        "g1": g1, "b1": b1, "g2": g2, "b2": b2,
    }

    out = jax.block_until_ready(resnet_block_forward(x, params))
    ref = jax.block_until_ready(_ref_forward(x, w1_oihw, g1, b1, w2_oihw, g2, b2))

    assert out.shape == (N, C, H, W)
    # Tolerance relaxed deliberately (was 1e-4 for the all-f32 variant): the
    # conv operands are rounded to bf16 for the MXU (f32 accumulation), which
    # introduces ~1e-2-level absolute error across two conv+BN stages.
    assert jnp.allclose(out, ref, atol=1e-1, rtol=1e-3), \
        f"max abs err = {jnp.max(jnp.abs(out - ref))}"

    print("KERNEL_OK")
</pallas_src>

<mosaic_0001>
module attributes {stable_mosaic.version = 11 : i64} {
  func.func @_resnet_block_kernel(%arg0: memref<2x16x128xf32, #tpu.memory_space<vmem>>, %arg1: memref<384x128xbf16, #tpu.memory_space<vmem>>, %arg2: memref<1x128xf32, #tpu.memory_space<vmem>>, %arg3: memref<1x128xf32, #tpu.memory_space<vmem>>, %arg4: memref<384x128xbf16, #tpu.memory_space<vmem>>, %arg5: memref<1x128xf32, #tpu.memory_space<vmem>>, %arg6: memref<1x128xf32, #tpu.memory_space<vmem>>, %arg7: memref<128x128xf32, #tpu.memory_space<vmem>>, %arg8: memref<32x128xf32, #tpu.memory_space<vmem>>) attributes {dimension_semantics = [], scalar_prefetch = 0 : i64, scratch_operands = 0 : i64, tpu.core_type = #tpu.core_type<tc>} {
    %c0 = arith.constant 0 : index
    %c0_0 = arith.constant 0 : index
    %0 = vector.load %arg7[%c0, %c0_0] : memref<128x128xf32, #tpu.memory_space<vmem>>, vector<128x128xf32>
    %cst = arith.constant 0.000000e+00 : f32
    %1 = vector.broadcast %cst : f32 to vector<6x128xf32>
    %c0_1 = arith.constant 0 : index
    %c0_2 = arith.constant 0 : index
    %c0_3 = arith.constant 0 : index
    %2 = vector.load %arg0[%c0_1, %c0_2, %c0_3] : memref<2x16x128xf32, #tpu.memory_space<vmem>>, vector<2x16x128xf32>
    %3 = vector.extract_strided_slice %2 {offsets = [0, 1, 0], sizes = [2, 1, 128], strides = [1, 1, 1]} : vector<2x16x128xf32> to vector<2x1x128xf32>
    %4 = vector.extract_strided_slice %2 {offsets = [0, 14, 0], sizes = [2, 1, 128], strides = [1, 1, 1]} : vector<2x16x128xf32> to vector<2x1x128xf32>
    %5 = tpu.concatenate %3, %2, %4 in 1 : vector<2x1x128xf32>, vector<2x16x128xf32>, vector<2x1x128xf32> -> vector<2x18x128xf32>
    %6 = vector.extract_strided_slice %5 {offsets = [0, 0, 0], sizes = [2, 16, 128], strides = [1, 1, 1]} : vector<2x18x128xf32> to vector<2x16x128xf32>
    %7 = vector.extract_strided_slice %5 {offsets = [0, 1, 0], sizes = [2, 16, 128], strides = [1, 1, 1]} : vector<2x18x128xf32> to vector<2x16x128xf32>
    %8 = vector.extract_strided_slice %5 {offsets = [0, 2, 0], sizes = [2, 16, 128], strides = [1, 1, 1]} : vector<2x18x128xf32> to vector<2x16x128xf32>
    %9 = tpu.concatenate %6, %7, %8 in 2 : vector<2x16x128xf32>, vector<2x16x128xf32>, vector<2x16x128xf32> -> vector<2x16x384xf32>
    %10 = vector.shape_cast %9 : vector<2x16x384xf32> to vector<32x384xf32>
    %11 = arith.truncf %10 : vector<32x384xf32> to vector<32x384xbf16>
    %c0_4 = arith.constant 0 : index
    %c0_5 = arith.constant 0 : index
    %12 = vector.load %arg1[%c0_4, %c0_5] : memref<384x128xbf16, #tpu.memory_space<vmem>>, vector<384x128xbf16>
    %cst_6 = arith.constant dense<0.000000e+00> : vector<32x128xf32>
    %13 = tpu.matmul %11, %12, %cst_6 {dimension_numbers = #tpu.dot_dimension_numbers<[1], [0], [0], [1], [0, 0, 1, 1], [], []>} : vector<32x384xbf16>, vector<384x128xbf16>, vector<32x128xf32> -> vector<32x128xf32>
    %cst_7 = arith.constant dense<0.000000e+00> : vector<128xf32>
    %14 = vector.multi_reduction <add>, %13, %cst_7 [0] : vector<32x128xf32> to vector<128xf32>
    %15 = vector.shape_cast %14 : vector<128xf32> to vector<1x128xf32>
    %16 = arith.mulf %13, %13 : vector<32x128xf32>
    %cst_8 = arith.constant dense<0.000000e+00> : vector<128xf32>
    %17 = vector.multi_reduction <add>, %16, %cst_8 [0] : vector<32x128xf32> to vector<128xf32>
    %18 = vector.shape_cast %17 : vector<128xf32> to vector<1x128xf32>
    %19 = tpu.concatenate %15, %18, %1 in 0 : vector<1x128xf32>, vector<1x128xf32>, vector<6x128xf32> -> vector<8x128xf32>
    %cst_9 = arith.constant dense<0.000000e+00> : vector<8x128xf32>
    %20 = tpu.matmul %19, %0, %cst_9 {dimension_numbers = #tpu.dot_dimension_numbers<[1], [0], [0], [1], [0, 0, 1, 1], [], []>} : vector<8x128xf32>, vector<128x128xf32>, vector<8x128xf32> -> vector<8x128xf32>
    %21 = vector.extract_strided_slice %20 {offsets = [0, 0], sizes = [1, 128], strides = [1, 1]} : vector<8x128xf32> to vector<1x128xf32>
    %22 = vector.extract_strided_slice %20 {offsets = [1, 0], sizes = [1, 128], strides = [1, 1]} : vector<8x128xf32> to vector<1x128xf32>
    %23 = arith.mulf %21, %21 : vector<1x128xf32>
    %24 = arith.subf %22, %23 : vector<1x128xf32>
    %cst_10 = arith.constant 9.99999974E-6 : f32
    %25 = vector.broadcast %cst_10 : f32 to vector<1x128xf32>
    %26 = arith.addf %24, %25 : vector<1x128xf32>
    %27 = math.rsqrt %26 : vector<1x128xf32>
    %c0_11 = arith.constant 0 : index
    %c0_12 = arith.constant 0 : index
    %28 = vector.load %arg2[%c0_11, %c0_12] : memref<1x128xf32, #tpu.memory_space<vmem>>, vector<1x128xf32>
    %29 = arith.mulf %27, %28 : vector<1x128xf32>
    %c0_13 = arith.constant 0 : index
    %c0_14 = arith.constant 0 : index
    %30 = vector.load %arg3[%c0_13, %c0_14] : memref<1x128xf32, #tpu.memory_space<vmem>>, vector<1x128xf32>
    %31 = arith.mulf %21, %29 : vector<1x128xf32>
    %32 = arith.subf %30, %31 : vector<1x128xf32>
    %33 = vector.broadcast %29 : vector<1x128xf32> to vector<32x128xf32>
    %34 = arith.mulf %13, %33 : vector<32x128xf32>
    %35 = vector.broadcast %32 : vector<1x128xf32> to vector<32x128xf32>
    %36 = arith.addf %34, %35 : vector<32x128xf32>
    %cst_15 = arith.constant 0.000000e+00 : f32
    %37 = vector.broadcast %cst_15 : f32 to vector<32x128xf32>
    %38 = arith.maximumf %36, %37 : vector<32x128xf32>
    %39 = vector.shape_cast %38 : vector<32x128xf32> to vector<2x16x128xf32>
    %40 = vector.extract_strided_slice %39 {offsets = [0, 1, 0], sizes = [2, 1, 128], strides = [1, 1, 1]} : vector<2x16x128xf32> to vector<2x1x128xf32>
    %41 = vector.extract_strided_slice %39 {offsets = [0, 14, 0], sizes = [2, 1, 128], strides = [1, 1, 1]} : vector<2x16x128xf32> to vector<2x1x128xf32>
    %42 = tpu.concatenate %40, %39, %41 in 1 : vector<2x1x128xf32>, vector<2x16x128xf32>, vector<2x1x128xf32> -> vector<2x18x128xf32>
    %43 = vector.extract_strided_slice %42 {offsets = [0, 0, 0], sizes = [2, 16, 128], strides = [1, 1, 1]} : vector<2x18x128xf32> to vector<2x16x128xf32>
    %44 = vector.extract_strided_slice %42 {offsets = [0, 1, 0], sizes = [2, 16, 128], strides = [1, 1, 1]} : vector<2x18x128xf32> to vector<2x16x128xf32>
    %45 = vector.extract_strided_slice %42 {offsets = [0, 2, 0], sizes = [2, 16, 128], strides = [1, 1, 1]} : vector<2x18x128xf32> to vector<2x16x128xf32>
    %46 = tpu.concatenate %43, %44, %45 in 2 : vector<2x16x128xf32>, vector<2x16x128xf32>, vector<2x16x128xf32> -> vector<2x16x384xf32>
    %47 = vector.shape_cast %46 : vector<2x16x384xf32> to vector<32x384xf32>
    %48 = arith.truncf %47 : vector<32x384xf32> to vector<32x384xbf16>
    %c0_16 = arith.constant 0 : index
    %c0_17 = arith.constant 0 : index
    %49 = vector.load %arg4[%c0_16, %c0_17] : memref<384x128xbf16, #tpu.memory_space<vmem>>, vector<384x128xbf16>
    %cst_18 = arith.constant dense<0.000000e+00> : vector<32x128xf32>
    %50 = tpu.matmul %48, %49, %cst_18 {dimension_numbers = #tpu.dot_dimension_numbers<[1], [0], [0], [1], [0, 0, 1, 1], [], []>} : vector<32x384xbf16>, vector<384x128xbf16>, vector<32x128xf32> -> vector<32x128xf32>
    %cst_19 = arith.constant dense<0.000000e+00> : vector<128xf32>
    %51 = vector.multi_reduction <add>, %50, %cst_19 [0] : vector<32x128xf32> to vector<128xf32>
    %52 = vector.shape_cast %51 : vector<128xf32> to vector<1x128xf32>
    %53 = arith.mulf %50, %50 : vector<32x128xf32>
    %cst_20 = arith.constant dense<0.000000e+00> : vector<128xf32>
    %54 = vector.multi_reduction <add>, %53, %cst_20 [0] : vector<32x128xf32> to vector<128xf32>
    %55 = vector.shape_cast %54 : vector<128xf32> to vector<1x128xf32>
    %56 = tpu.concatenate %52, %55, %1 in 0 : vector<1x128xf32>, vector<1x128xf32>, vector<6x128xf32> -> vector<8x128xf32>
    %cst_21 = arith.constant dense<0.000000e+00> : vector<8x128xf32>
    %57 = tpu.matmul %56, %0, %cst_21 {dimension_numbers = #tpu.dot_dimension_numbers<[1], [0], [0], [1], [0, 0, 1, 1], [], []>} : vector<8x128xf32>, vector<128x128xf32>, vector<8x128xf32> -> vector<8x128xf32>
    %58 = vector.extract_strided_slice %57 {offsets = [0, 0], sizes = [1, 128], strides = [1, 1]} : vector<8x128xf32> to vector<1x128xf32>
    %59 = vector.extract_strided_slice %57 {offsets = [1, 0], sizes = [1, 128], strides = [1, 1]} : vector<8x128xf32> to vector<1x128xf32>
    %60 = arith.mulf %58, %58 : vector<1x128xf32>
    %61 = arith.subf %59, %60 : vector<1x128xf32>
    %cst_22 = arith.constant 9.99999974E-6 : f32
    %62 = vector.broadcast %cst_22 : f32 to vector<1x128xf32>
    %63 = arith.addf %61, %62 : vector<1x128xf32>
    %64 = math.rsqrt %63 : vector<1x128xf32>
    %c0_23 = arith.constant 0 : index
    %c0_24 = arith.constant 0 : index
    %65 = vector.load %arg5[%c0_23, %c0_24] : memref<1x128xf32, #tpu.memory_space<vmem>>, vector<1x128xf32>
    %66 = arith.mulf %64, %65 : vector<1x128xf32>
    %c0_25 = arith.constant 0 : index
    %c0_26 = arith.constant 0 : index
    %67 = vector.load %arg6[%c0_25, %c0_26] : memref<1x128xf32, #tpu.memory_space<vmem>>, vector<1x128xf32>
    %68 = arith.mulf %58, %66 : vector<1x128xf32>
    %69 = arith.subf %67, %68 : vector<1x128xf32>
    %70 = vector.broadcast %66 : vector<1x128xf32> to vector<32x128xf32>
    %71 = arith.mulf %50, %70 : vector<32x128xf32>
    %72 = vector.broadcast %69 : vector<1x128xf32> to vector<32x128xf32>
    %73 = arith.addf %71, %72 : vector<32x128xf32>
    %74 = vector.shape_cast %2 : vector<2x16x128xf32> to vector<32x128xf32>
    %75 = arith.addf %73, %74 : vector<32x128xf32>
    %c0_27 = arith.constant 0 : index
    %c0_28 = arith.constant 0 : index
    %76 = vector.load %arg8[%c0_27, %c0_28] : memref<32x128xf32, #tpu.memory_space<vmem>>, vector<32x128xf32>
    tpu.vector_store %arg8[%c0_27, %c0_28], %75 {strides = array<i32>} : memref<32x128xf32, #tpu.memory_space<vmem>>, vector<32x128xf32>,
    return
  }
}

</mosaic_0001>

<llo_original>
// kernel: tpu_custom_call.1
$region0: #{tpu_custom_call.1}
  #allocation0 [shape = 'u32[]', space=smem, size = 0x4, offset = 0x4, fixed_abs, tag = 'smem constant byte address 0x4 - core index']
  #allocation1 [shape = 'u32[144,128]{1,0:T(1,128)}', space=vmem, size = 0x12000, scoped, tag = 'internal scratch']
  %s0 = inlined_call_operand.hbm [shape: f32[2,16,128], index: 0, kind: input, shape index: {}]
  %s1 = inlined_call_operand.hbm [shape: bf16[384,128], index: 1, kind: input, shape index: {}]
  %s2 = inlined_call_operand.vmem [shape: f32[1,128], index: 2, kind: input, shape index: {}]
  %s3 = inlined_call_operand.vmem [shape: f32[1,128], index: 3, kind: input, shape index: {}]
  %s4 = inlined_call_operand.hbm [shape: bf16[384,128], index: 4, kind: input, shape index: {}]
  %s5 = inlined_call_operand.vmem [shape: f32[1,128], index: 5, kind: input, shape index: {}]
  %s6 = inlined_call_operand.vmem [shape: f32[1,128], index: 6, kind: input, shape index: {}]
  %s7 = inlined_call_operand.hbm [shape: f32[128,128], index: 7, kind: input, shape index: {}]
  %s8 = inlined_call_operand.hbm [shape: f32[32,128], index: 8, kind: output, shape index: {}]
  %s9 = sld [smem:[#allocation0]]
  $region58: #{tpu_custom_call.1} parent=0
    _
  %s11 = ssub.s32 1, %s9
  %s12 = scalar_select 0, %s11, %s9
  $region1: #{tpu_custom_call.1} parent=0
    #allocation2 [shape = 'u8[16384]{0}', space=vmem, size = 0x4000, scoped, tag = 'input window, operand 0, single buffered']
    #allocation3 [shape = 's32[1]{0}', space=sflag, size = 0x4, scoped, tag = 'scoped memory for tpu_custom_call.1']
    #allocation4 [shape = 's32[1]{0}', space=sflag, size = 0x4, scoped, tag = 'scoped memory for tpu_custom_call.1']
    #allocation5 [shape = 'u8[98304]{0}', space=vmem, size = 0x18000, scoped, tag = 'input window, operand 1, single buffered']
    #allocation6 [shape = 's32[1]{0}', space=sflag, size = 0x4, scoped, tag = 'scoped memory for tpu_custom_call.1']
    #allocation7 [shape = 'u8[98304]{0}', space=vmem, size = 0x18000, scoped, tag = 'input window, operand 4, single buffered']
    #allocation8 [shape = 'u8[65536]{0}', space=vmem, size = 0x10000, scoped, tag = 'input window, operand 7, single buffered']
    #allocation9 [shape = 's32[1]{0}', space=sflag, size = 0x4, scoped, tag = 'scoped memory for tpu_custom_call.1']
    #allocation10 [shape = 'u8[16384]{0}', space=vmem, size = 0x4000, scoped, tag = 'output window, operand 0, single buffered']
    %13 = vsyncpa [#allocation3], 0
    %14 = vsyncpa [#allocation6], 0
    %15 = vsyncpa [#allocation9], 0
    %16 = vsyncpa [#allocation4], 0
    // Predicated region
    $region2: #{tpu_custom_call.1} parent=1 // pred_check
      _
    $region3: #{tpu_custom_call.1} parent=1 // pred_check_branch
      %18 = sbr.rel (0) target = $region5
    $region4: #{tpu_custom_call.1} parent=1 // pred_region
      %s20 = ssub.s32 512, 512
      %21 = vsyncadd [#allocation3], %s20
      %s22 = sshll.u32 [#allocation2], 4
      %s23 = int_to_ptr.vmem [resolvable:$true] %s22
      %28 = dma.hbm_to_vmem [thread:$0]  %s0, 512, %s23, [#allocation3], 128, 128, 8
    $region5: #{tpu_custom_call.1} parent=1 // pred_fallthru
      _
    // Predicated region
    $region6: #{tpu_custom_call.1} parent=1 // pred_check
      _
    $region7: #{tpu_custom_call.1} parent=1 // pred_check_branch
      %30 = sbr.rel (0) target = $region9
    $region8: #{tpu_custom_call.1} parent=1 // pred_region
      %s32 = ssub.s32 3072, 3072
      %33 = vsyncadd [#allocation6], %s32
      %s34 = sshll.u32 [#allocation5], 4
      %s35 = int_to_ptr.vmem [resolvable:$true] %s34
      %40 = dma.hbm_to_vmem [thread:$0]  %s1, 3072, %s35, [#allocation6], 64, 64, 4
    $region9: #{tpu_custom_call.1} parent=1 // pred_fallthru
      _
    // Predicated region
    $region10: #{tpu_custom_call.1} parent=1 // pred_check
      _
    $region11: #{tpu_custom_call.1} parent=1 // pred_check_branch
      %42 = sbr.rel (0) target = $region13
    $region12: #{tpu_custom_call.1} parent=1 // pred_region
      _
    $region13: #{tpu_custom_call.1} parent=1 // pred_fallthru
      _
    // Predicated region
    $region14: #{tpu_custom_call.1} parent=1 // pred_check
      _
    $region15: #{tpu_custom_call.1} parent=1 // pred_check_branch
      %44 = sbr.rel (0) target = $region17
    $region16: #{tpu_custom_call.1} parent=1 // pred_region
      _
    $region17: #{tpu_custom_call.1} parent=1 // pred_fallthru
      _
    // Predicated region
    $region18: #{tpu_custom_call.1} parent=1 // pred_check
      _
    $region19: #{tpu_custom_call.1} parent=1 // pred_check_branch
      %46 = sbr.rel (0) target = $region21
    $region20: #{tpu_custom_call.1} parent=1 // pred_region
      %s48 = ssub.s32 3072, 3072
      %49 = vsyncadd [#allocation6], %s48
      %s50 = sshll.u32 [#allocation7], 4
      %s51 = int_to_ptr.vmem [resolvable:$true] %s50
      %56 = dma.hbm_to_vmem [thread:$0]  %s4, 3072, %s51, [#allocation6], 64, 64, 4
    $region21: #{tpu_custom_call.1} parent=1 // pred_fallthru
      _
    // Predicated region
    $region22: #{tpu_custom_call.1} parent=1 // pred_check
      _
    $region23: #{tpu_custom_call.1} parent=1 // pred_check_branch
      %58 = sbr.rel (0) target = $region25
    $region24: #{tpu_custom_call.1} parent=1 // pred_region
      _
    $region25: #{tpu_custom_call.1} parent=1 // pred_fallthru
      _
    // Predicated region
    $region26: #{tpu_custom_call.1} parent=1 // pred_check
      _
    $region27: #{tpu_custom_call.1} parent=1 // pred_check_branch
      %60 = sbr.rel (0) target = $region29
    $region28: #{tpu_custom_call.1} parent=1 // pred_region
      _
    $region29: #{tpu_custom_call.1} parent=1 // pred_fallthru
      _
    // Predicated region
    $region30: #{tpu_custom_call.1} parent=1 // pred_check
      _
    $region31: #{tpu_custom_call.1} parent=1 // pred_check_branch
      %62 = sbr.rel (0) target = $region33
    $region32: #{tpu_custom_call.1} parent=1 // pred_region
      %s64 = ssub.s32 2048, 2048
      %65 = vsyncadd [#allocation9], %s64
      %s66 = sshll.u32 [#allocation8], 4
      %s67 = int_to_ptr.vmem [resolvable:$true] %s66
      %72 = dma.hbm_to_vmem [thread:$0]  %s7, 2048, %s67, [#allocation9], 128, 128, 8
    $region33: #{tpu_custom_call.1} parent=1 // pred_fallthru
      _
    // Predicated region
    $region34: #{tpu_custom_call.1} parent=1 // pred_check
      _
    $region35: #{tpu_custom_call.1} parent=1 // pred_check_branch
      %74 = sbr.rel (0) target = $region37
    $region36: #{tpu_custom_call.1} parent=1 // pred_region
      %75 = dma.done [#allocation3], 512
    $region37: #{tpu_custom_call.1} parent=1 // pred_fallthru
      _
    // Predicated region
    $region38: #{tpu_custom_call.1} parent=1 // pred_check
      _
    $region39: #{tpu_custom_call.1} parent=1 // pred_check_branch
      %77 = sbr.rel (0) target = $region41
    $region40: #{tpu_custom_call.1} parent=1 // pred_region
      %78 = dma.done [#allocation6], 3072
    $region41: #{tpu_custom_call.1} parent=1 // pred_fallthru
      _
    // Predicated region
    $region42: #{tpu_custom_call.1} parent=1 // pred_check
      _
    $region43: #{tpu_custom_call.1} parent=1 // pred_check_branch
      %80 = sbr.rel (0) target = $region45
    $region44: #{tpu_custom_call.1} parent=1 // pred_region
      %81 = dma.done [#allocation6], 3072
    $region45: #{tpu_custom_call.1} parent=1 // pred_fallthru
      _
    // Predicated region
    $region46: #{tpu_custom_call.1} parent=1 // pred_check
      _
    $region47: #{tpu_custom_call.1} parent=1 // pred_check_branch
      %83 = sbr.rel (0) target = $region49
    $region48: #{tpu_custom_call.1} parent=1 // pred_region
      %84 = dma.done [#allocation9], 2048
    $region49: #{tpu_custom_call.1} parent=1 // pred_fallthru
      _
    %v86 = vld [vmem:[#allocation8] sm:$0xff]
    %v87 = vld [vmem:[#allocation8 + $0x8] sm:$0xff]
    %v88 = vld [vmem:[#allocation8 + $0x10] sm:$0xff]
    %v89 = vld [vmem:[#allocation8 + $0x18] sm:$0xff]
    %v90 = vld [vmem:[#allocation8 + $0x20] sm:$0xff]
    %v91 = vld [vmem:[#allocation8 + $0x28] sm:$0xff]
    %v92 = vld [vmem:[#allocation8 + $0x30] sm:$0xff]
    %v93 = vld [vmem:[#allocation8 + $0x38] sm:$0xff]
    %v94 = vld [vmem:[#allocation8 + $0x40] sm:$0xff]
    %v95 = vld [vmem:[#allocation8 + $0x48] sm:$0xff]
    %v96 = vld [vmem:[#allocation8 + $0x50] sm:$0xff]
    %v97 = vld [vmem:[#allocation8 + $0x58] sm:$0xff]
    %v98 = vld [vmem:[#allocation8 + $0x60] sm:$0xff]
    %v99 = vld [vmem:[#allocation8 + $0x68] sm:$0xff]
    %v100 = vld [vmem:[#allocation8 + $0x70] sm:$0xff]
    %v101 = vld [vmem:[#allocation8 + $0x78] sm:$0xff]
    %v102 = vld [vmem:[#allocation2] sm:$0xff]
    %v103 = vld [vmem:[#allocation2 + $0x8] sm:$0xff]
    %v104 = vld [vmem:[#allocation2 + $0x10] sm:$0xff]
    %v105 = vld [vmem:[#allocation2 + $0x18] sm:$0xff]
    %v108 = vrot.slane %v102, 1
    %v109 = vrot.slane %v104, 1
    %vm114 = vcmask 1040384
    %v115 = vrot.slane %v102, 7
    %v116 = vrot.slane %v103, 7
    %v117 = vsel %vm114, %v115, %v116
    %v118 = vrot.slane %v104, 7
    %v119 = vrot.slane %v105, 7
    %v120 = vsel %vm114, %v118, %v119
    %v127 = vrot.slane %v103, 5
    %v128 = vrot.slane %v105, 5
    %v131 = vsel %vm114, %v108, %v115
    %v132 = vsel %vm114, %v109, %v118
    %v133 = vsel %vm114, %v116, %v127
    %v134 = vsel %vm114, %v119, %v128
    %vm139 = vcmask 1046528
    %v140 = vrot.slane %v131, 1
    %v141 = vrot.slane %v117, 1
    %v142 = vsel %vm139, %v140, %v141
    %v143 = vrot.slane %v133, 1
    %v144 = vsel %vm139, %v141, %v143
    %v145 = vrot.slane %v132, 1
    %v146 = vrot.slane %v120, 1
    %v147 = vsel %vm139, %v145, %v146
    %v148 = vrot.slane %v134, 1
    %v149 = vsel %vm139, %v146, %v148
    %vm154 = vcmask 1045504
    %v155 = vrot.slane %v131, 2
    %v156 = vrot.slane %v117, 2
    %v157 = vsel %vm154, %v155, %v156
    %v158 = vrot.slane %v133, 2
    %v159 = vsel %vm154, %v156, %v158
    %v160 = vrot.slane %v132, 2
    %v161 = vrot.slane %v120, 2
    %v162 = vsel %vm154, %v160, %v161
    %v163 = vrot.slane %v134, 2
    %v164 = vsel %vm154, %v161, %v163
    %v169 = vpack.c.bf16 %v117, %v131
    %v170 = vpack.c.bf16 %v144, %v142
    %v171 = vpack.c.bf16 %v159, %v157
    %v172 = vpack.c.bf16 %v120, %v132
    %v173 = vpack.c.bf16 %v149, %v147
    %v174 = vpack.c.bf16 %v164, %v162
    %v175 = vld [vmem:[#allocation5] sm:$0xf]
    %v176 = vld [vmem:[#allocation5 + $0x4] sm:$0xf]
    %v177 = vld [vmem:[#allocation5 + $0x8] sm:$0xf]
    %v178 = vld [vmem:[#allocation5 + $0xc] sm:$0xf]
    %v179 = vld [vmem:[#allocation5 + $0x10] sm:$0xf]
    %v180 = vld [vmem:[#allocation5 + $0x14] sm:$0xf]
    %v181 = vld [vmem:[#allocation5 + $0x18] sm:$0xf]
    %v182 = vld [vmem:[#allocation5 + $0x1c] sm:$0xf]
    %v183 = vld [vmem:[#allocation5 + $0x20] sm:$0xf]
    %v184 = vld [vmem:[#allocation5 + $0x24] sm:$0xf]
    %v185 = vld [vmem:[#allocation5 + $0x28] sm:$0xf]
    %v186 = vld [vmem:[#allocation5 + $0x2c] sm:$0xf]
    %v187 = vld [vmem:[#allocation5 + $0x30] sm:$0xf]
    %v188 = vld [vmem:[#allocation5 + $0x34] sm:$0xf]
    %v189 = vld [vmem:[#allocation5 + $0x38] sm:$0xf]
    %v190 = vld [vmem:[#allocation5 + $0x3c] sm:$0xf]
    %v191 = vld [vmem:[#allocation5 + $0x40] sm:$0xf]
    %v192 = vld [vmem:[#allocation5 + $0x44] sm:$0xf]
    %v193 = vld [vmem:[#allocation5 + $0x48] sm:$0xf]
    %v194 = vld [vmem:[#allocation5 + $0x4c] sm:$0xf]
    %v195 = vld [vmem:[#allocation5 + $0x50] sm:$0xf]
    %v196 = vld [vmem:[#allocation5 + $0x54] sm:$0xf]
    %v197 = vld [vmem:[#allocation5 + $0x58] sm:$0xf]
    %v198 = vld [vmem:[#allocation5 + $0x5c] sm:$0xf]
    %v199 = vld [vmem:[#allocation5 + $0x60] sm:$0xf]
    %v200 = vld [vmem:[#allocation5 + $0x64] sm:$0xf]
    %v201 = vld [vmem:[#allocation5 + $0x68] sm:$0xf]
    %v202 = vld [vmem:[#allocation5 + $0x6c] sm:$0xf]
    %v203 = vld [vmem:[#allocation5 + $0x70] sm:$0xf]
    %v204 = vld [vmem:[#allocation5 + $0x74] sm:$0xf]
    %v205 = vld [vmem:[#allocation5 + $0x78] sm:$0xf]
    %v206 = vld [vmem:[#allocation5 + $0x7c] sm:$0xf]
    %v207 = vld [vmem:[#allocation5 + $0x80] sm:$0xf]
    %v208 = vld [vmem:[#allocation5 + $0x84] sm:$0xf]
    %v209 = vld [vmem:[#allocation5 + $0x88] sm:$0xf]
    %v210 = vld [vmem:[#allocation5 + $0x8c] sm:$0xf]
    %v211 = vld [vmem:[#allocation5 + $0x90] sm:$0xf]
    %v212 = vld [vmem:[#allocation5 + $0x94] sm:$0xf]
    %v213 = vld [vmem:[#allocation5 + $0x98] sm:$0xf]
    %v214 = vld [vmem:[#allocation5 + $0x9c] sm:$0xf]
    %v215 = vld [vmem:[#allocation5 + $0xa0] sm:$0xf]
    %v216 = vld [vmem:[#allocation5 + $0xa4] sm:$0xf]
    %v217 = vld [vmem:[#allocation5 + $0xa8] sm:$0xf]
    %v218 = vld [vmem:[#allocation5 + $0xac] sm:$0xf]
    %v219 = vld [vmem:[#allocation5 + $0xb0] sm:$0xf]
    %v220 = vld [vmem:[#allocation5 + $0xb4] sm:$0xf]
    %v221 = vld [vmem:[#allocation5 + $0xb8] sm:$0xf]
    %v222 = vld [vmem:[#allocation5 + $0xbc] sm:$0xf]
    %v271 = vunpack.c.l.b16 %v175
    %v272 = vunpack.c.l.b16 %v176
    %v273 = vunpack.c.l.b16 %v177
    %v274 = vunpack.c.l.b16 %v178
    %v275 = vunpack.c.l.b16 %v179
    %v276 = vunpack.c.l.b16 %v180
    %v277 = vunpack.c.l.b16 %v181
    %v278 = vunpack.c.l.b16 %v182
    %v279 = vunpack.c.l.b16 %v183
    %v280 = vunpack.c.l.b16 %v184
    %v281 = vunpack.c.l.b16 %v185
    %v282 = vunpack.c.l.b16 %v186
    %v283 = vunpack.c.l.b16 %v187
    %v284 = vunpack.c.l.b16 %v188
    %v285 = vunpack.c.l.b16 %v189
    %v286 = vunpack.c.l.b16 %v190
    %v287 = vunpack.c.l.b16 %v191
    %v288 = vunpack.c.l.b16 %v192
    %v289 = vunpack.c.l.b16 %v193
    %v290 = vunpack.c.l.b16 %v194
    %v291 = vunpack.c.l.b16 %v195
    %v292 = vunpack.c.l.b16 %v196
    %v293 = vunpack.c.l.b16 %v197
    %v294 = vunpack.c.l.b16 %v198
    %v295 = vunpack.c.l.b16 %v199
    %v296 = vunpack.c.l.b16 %v200
    %v297 = vunpack.c.l.b16 %v201
    %v298 = vunpack.c.l.b16 %v202
    %v299 = vunpack.c.l.b16 %v203
    %v300 = vunpack.c.l.b16 %v204
    %v301 = vunpack.c.l.b16 %v205
    %v302 = vunpack.c.l.b16 %v206
    %v303 = vunpack.c.l.b16 %v207
    %v304 = vunpack.c.l.b16 %v208
    %v305 = vunpack.c.l.b16 %v209
    %v306 = vunpack.c.l.b16 %v210
    %v307 = vunpack.c.l.b16 %v211
    %v308 = vunpack.c.l.b16 %v212
    %v309 = vunpack.c.l.b16 %v213
    %v310 = vunpack.c.l.b16 %v214
    %v311 = vunpack.c.l.b16 %v215
    %v312 = vunpack.c.l.b16 %v216
    %v313 = vunpack.c.l.b16 %v217
    %v314 = vunpack.c.l.b16 %v218
    %v315 = vunpack.c.l.b16 %v219
    %v316 = vunpack.c.l.b16 %v220
    %v317 = vunpack.c.l.b16 %v221
    %v318 = vunpack.c.l.b16 %v222
    %v319 = vpack.c.b16 %v272, %v271
    %v320 = vpack.c.b16 %v274, %v273
    %v321 = vpack.c.b16 %v276, %v275
    %v322 = vpack.c.b16 %v278, %v277
    %v323 = vpack.c.b16 %v280, %v279
    %v324 = vpack.c.b16 %v282, %v281
    %v325 = vpack.c.b16 %v284, %v283
    %v326 = vpack.c.b16 %v286, %v285
    %v327 = vpack.c.b16 %v288, %v287
    %v328 = vpack.c.b16 %v290, %v289
    %v329 = vpack.c.b16 %v292, %v291
    %v330 = vpack.c.b16 %v294, %v293
    %v331 = vpack.c.b16 %v296, %v295
    %v332 = vpack.c.b16 %v298, %v297
    %v333 = vpack.c.b16 %v300, %v299
    %v334 = vpack.c.b16 %v302, %v301
    %v335 = vpack.c.b16 %v304, %v303
    %v336 = vpack.c.b16 %v306, %v305
    %v337 = vpack.c.b16 %v308, %v307
    %v338 = vpack.c.b16 %v310, %v309
    %v339 = vpack.c.b16 %v312, %v311
    %v340 = vpack.c.b16 %v314, %v313
    %v341 = vpack.c.b16 %v316, %v315
    %v342 = vpack.c.b16 %v318, %v317
    %367 = vmatprep.subr.bf16.mxu0 0
    %368 = vmatpush1.bf16.msra.mxu0 %v326
    %369 = vmatprep.subr.bf16.mxu0 0
    %370 = vmatpush1.bf16.msra.mxu0 %v325
    %371 = vmatprep.subr.bf16.mxu0 0
    %372 = vmatpush1.bf16.msra.mxu0 %v324
    %373 = vmatprep.subr.bf16.mxu0 0
    %374 = vmatpush1.bf16.msra.mxu0 %v323
    %375 = vmatprep.subr.bf16.mxu0 0
    %376 = vmatpush1.bf16.msra.mxu0 %v322
    %377 = vmatprep.subr.bf16.mxu0 0
    %378 = vmatpush1.bf16.msra.mxu0 %v321
    %379 = vmatprep.subr.bf16.mxu0 0
    %380 = vmatpush1.bf16.msra.mxu0 %v320
    %381 = vmatprep.subr.bf16.mxu0 0
    %382 = vmatpush1.bf16.msra.mxu0 %v319
    %383 = vmatprep.subr.bf16.mxu0 0
    %384 = vmatpush2.bf16.msra.mxu0 %v334
    %385 = vmatprep.subr.bf16.mxu0 0
    %386 = vmatpush2.bf16.msra.mxu0 %v333
    %387 = vmatprep.subr.bf16.mxu0 0
    %388 = vmatpush2.bf16.msra.mxu0 %v332
    %389 = vmatprep.subr.bf16.mxu0 0
    %390 = vmatpush2.bf16.msra.mxu0 %v331
    %391 = vmatprep.subr.bf16.mxu0 0
    %392 = vmatpush2.bf16.msra.mxu0 %v330
    %393 = vmatprep.subr.bf16.mxu0 0
    %394 = vmatpush2.bf16.msra.mxu0 %v329
    %395 = vmatprep.subr.bf16.mxu0 0
    %396 = vmatpush2.bf16.msra.mxu0 %v328
    %397 = vmatprep.subr.bf16.mxu0 0
    %398 = vmatpush2.bf16.msra.mxu0 %v327
    %399 = vmatprep.mubr.bf16.mxu0 %v170
    %400 = vmatmul.mubr.bf16.gmra.mxu0 %v169
    %v401 = vpop.f32.mrf.mxu0
    %v402 = vadd.f32 0.0, %v401
    %v403 = vpop.f32.mrf.mxu0
    %v404 = vpop.f32.mrf.mxu0
    %v405 = vadd.f32 0.0, %v404
    %v406 = vpop.f32.mrf.mxu0
    %407 = vmatprep.mubr.bf16.mxu0 %v173
    %408 = vmatmul.mubr.bf16.gmra.mxu0 %v172
    %v409 = vpop.f32.mrf.mxu0
    %v410 = vadd.f32 0.0, %v409
    %v411 = vpop.f32.mrf.mxu0
    %v412 = vpop.f32.mrf.mxu0
    %v413 = vadd.f32 0.0, %v412
    %v414 = vpop.f32.mrf.mxu0
    %415 = vdwg.mxu0
    %416 = vmatprep.subr.bf16.mxu0 0
    %417 = vmatpush1.bf16.msra.mxu0 %v342
    %418 = vmatprep.subr.bf16.mxu0 0
    %419 = vmatpush1.bf16.msra.mxu0 %v341
    %420 = vmatprep.subr.bf16.mxu0 0
    %421 = vmatpush1.bf16.msra.mxu0 %v340
    %422 = vmatprep.subr.bf16.mxu0 0
    %423 = vmatpush1.bf16.msra.mxu0 %v339
    %424 = vmatprep.subr.bf16.mxu0 0
    %425 = vmatpush1.bf16.msra.mxu0 %v338
    %426 = vmatprep.subr.bf16.mxu0 0
    %427 = vmatpush1.bf16.msra.mxu0 %v337
    %428 = vmatprep.subr.bf16.mxu0 0
    %429 = vmatpush1.bf16.msra.mxu0 %v336
    %430 = vmatprep.subr.bf16.mxu0 0
    %431 = vmatpush1.bf16.msra.mxu0 %v335
    %432 = vmatprep.subr.bf16.mxu0 0
    %433 = vmatpush2.bf16.msra.mxu0 0
    %434 = vmatprep.subr.bf16.mxu0 0
    %435 = vmatpush2.bf16.msra.mxu0 0
    %436 = vmatprep.subr.bf16.mxu0 0
    %437 = vmatpush2.bf16.msra.mxu0 0
    %438 = vmatprep.subr.bf16.mxu0 0
    %439 = vmatpush2.bf16.msra.mxu0 0
    %440 = vmatprep.subr.bf16.mxu0 0
    %441 = vmatpush2.bf16.msra.mxu0 0
    %442 = vmatprep.subr.bf16.mxu0 0
    %443 = vmatpush2.bf16.msra.mxu0 0
    %444 = vmatprep.subr.bf16.mxu0 0
    %445 = vmatpush2.bf16.msra.mxu0 0
    %446 = vmatprep.subr.bf16.mxu0 0
    %447 = vmatpush2.bf16.msra.mxu0 0
    %448 = vmatprep.mubr.bf16.mxu0 0
    %449 = vmatmul.mubr.bf16.gmra.mxu0 %v171
    %v450 = vpop.f32.mrf.mxu0
    %v451 = vadd.f32 %v402, %v450
    %v452 = vpop.f32.mrf.mxu0
    %v453 = vpop.f32.mrf.mxu0
    %v454 = vadd.f32 %v405, %v453
    %v455 = vpop.f32.mrf.mxu0
    %456 = vmatprep.mubr.bf16.mxu0 0
    %457 = vmatmul.mubr.bf16.gmra.mxu0 %v174
    %v458 = vpop.f32.mrf.mxu0
    %v459 = vadd.f32 %v410, %v458
    %v460 = vpop.f32.mrf.mxu0
    %v461 = vpop.f32.mrf.mxu0
    %v462 = vadd.f32 %v413, %v461
    %v463 = vpop.f32.mrf.mxu0
    %464 = vdwg.mxu0
    %v465 = vadd.f32 %v451, %v454
    %v466 = vadd.f32 %v465, %v459
    %v467 = vadd.f32 %v466, %v462
    %v468 = vrot.slane %v467, 4
    %v469 = vadd.f32 %v467, %v468
    %v470 = vrot.slane %v469, 2
    %v471 = vadd.f32 %v469, %v470
    %v472 = vrot.slane %v471, 1
    %v473 = vadd.f32 %v471, %v472
    %v474 = vmul.f32 %v451, %v451
    %v475 = vmul.f32 %v454, %v454
    %v476 = vmul.f32 %v459, %v459
    %v477 = vmul.f32 %v462, %v462
    %v478 = vadd.f32 %v474, %v475
    %v479 = vadd.f32 %v478, %v476
    %v480 = vadd.f32 %v479, %v477
    %v481 = vrot.slane %v480, 4
    %v482 = vadd.f32 %v480, %v481
    %v483 = vrot.slane %v482, 2
    %v484 = vadd.f32 %v482, %v483
    %v485 = vrot.slane %v484, 1
    %v486 = vadd.f32 %v484, %v485
    %v487 = vsel %vm114, %v473, %v486
    %vm488 = vcmask 1041408
    %v489 = vsel %vm488, %v487, 0.0
    %490 = vmatprep.subr.mxu0 0.0
    %491 = vmatpush1.msra.mxu0 %v101
    %492 = vmatprep.subr.mxu0 0.0
    %493 = vmatpush1.msra.mxu0 %v100
    %494 = vmatprep.subr.mxu0 0.0
    %495 = vmatpush1.msra.mxu0 %v99
    %496 = vmatprep.subr.mxu0 0.0
    %497 = vmatpush1.msra.mxu0 %v98
    %498 = vmatprep.subr.mxu0 0.0
    %499 = vmatpush1.msra.mxu0 %v97
    %500 = vmatprep.subr.mxu0 0.0
    %501 = vmatpush1.msra.mxu0 %v96
    %502 = vmatprep.subr.mxu0 0.0
    %503 = vmatpush1.msra.mxu0 %v95
    %504 = vmatprep.subr.mxu0 0.0
    %505 = vmatpush1.msra.mxu0 %v94
    %506 = vmatprep.subr.mxu0 0.0
    %507 = vmatpush1.msra.mxu0 %v93
    %508 = vmatprep.subr.mxu0 0.0
    %509 = vmatpush1.msra.mxu0 %v92
    %510 = vmatprep.subr.mxu0 0.0
    %511 = vmatpush1.msra.mxu0 %v91
    %512 = vmatprep.subr.mxu0 0.0
    %513 = vmatpush1.msra.mxu0 %v90
    %514 = vmatprep.subr.mxu0 0.0
    %515 = vmatpush1.msra.mxu0 %v89
    %516 = vmatprep.subr.mxu0 0.0
    %517 = vmatpush1.msra.mxu0 %v88
    %518 = vmatprep.subr.mxu0 0.0
    %519 = vmatpush1.msra.mxu0 %v87
    %520 = vmatprep.subr.mxu0 0.0
    %521 = vmatpush1.msra.mxu0 %v86
    %522 = vmatprep.subr.mxu0 0.0
    %523 = vmatpush2.msra.mxu0 0.0
    %524 = vmatprep.subr.mxu0 0.0
    %525 = vmatpush2.msra.mxu0 0.0
    %526 = vmatprep.subr.mxu0 0.0
    %527 = vmatpush2.msra.mxu0 0.0
    %528 = vmatprep.subr.mxu0 0.0
    %529 = vmatpush2.msra.mxu0 0.0
    %530 = vmatprep.subr.mxu0 0.0
    %531 = vmatpush2.msra.mxu0 0.0
    %532 = vmatprep.subr.mxu0 0.0
    %533 = vmatpush2.msra.mxu0 0.0
    %534 = vmatprep.subr.mxu0 0.0
    %535 = vmatpush2.msra.mxu0 0.0
    %536 = vmatprep.subr.mxu0 0.0
    %537 = vmatpush2.msra.mxu0 0.0
    %538 = vmatprep.subr.mxu0 0.0
    %539 = vmatpush2.msra.mxu0 0.0
    %540 = vmatprep.subr.mxu0 0.0
    %541 = vmatpush2.msra.mxu0 0.0
    %542 = vmatprep.subr.mxu0 0.0
    %543 = vmatpush2.msra.mxu0 0.0
    %544 = vmatprep.subr.mxu0 0.0
    %545 = vmatpush2.msra.mxu0 0.0
    %546 = vmatprep.subr.mxu0 0.0
    %547 = vmatpush2.msra.mxu0 0.0
    %548 = vmatprep.subr.mxu0 0.0
    %549 = vmatpush2.msra.mxu0 0.0
    %550 = vmatprep.subr.mxu0 0.0
    %551 = vmatpush2.msra.mxu0 0.0
    %552 = vmatprep.subr.mxu0 0.0
    %553 = vmatpush2.msra.mxu0 0.0
    %554 = vmatprep.mubr.f32.mxu0 0.0
    %555 = vmatmul.mubr.f32.gmra.mxu0 %v489
    %v556 = vpop.f32.mrf.mxu0
    %v557 = vadd.f32 0.0, %v556
    %v558 = vpop.f32.mrf.mxu0
    %559 = vdwg.mxu0
    %v560 = vmul.f32 %v557, %v557
    %v562 = vrot.slane %v560, 7
    %v564 = vsub.f32 %v557, %v562
    %v565 = vadd.f32 %v564, 1e-05
    %v566 = vrsqrt.pop %v565
    %v567 = vld [vmem:[%s2] sm:$0x1]
    %v569 = vlaneseq
    %v570 = vshrl.u32 %v569, 7
    %v571 = vsub.s32 0, %v570
    %v572 = vrot.slane %v567, %v571
    %v574 = vmul.f32 %v566, %v572
    %v575 = vld [vmem:[%s3] sm:$0x1]
    %v577 = vrot.slane %v574, 1
    %v579 = vmul.f32 %v557, %v577
    %v580 = vsub.f32 %v575, %v579
    %v581 = vlaneseq
    %v582 = vshrl.u32 %v581, 7
    %v583 = vsub.s32 1, %v582
    %v584 = vrot.slane %v574, %v583
    %v585 = vmul.f32 %v451, %v584
    %v586 = vmul.f32 %v454, %v584
    %v587 = vmul.f32 %v459, %v584
    %v588 = vmul.f32 %v462, %v584
    %v590 = vlaneseq
    %v591 = vshrl.u32 %v590, 7
    %v592 = vsub.s32 0, %v591
    %v593 = vrot.slane %v580, %v592
    %v595 = vadd.f32 %v585, %v593
    %v596 = vadd.f32 %v586, %v593
    %v597 = vadd.f32 %v587, %v593
    %v598 = vadd.f32 %v588, %v593
    %v599 = vmax.f32 %v595, 0.0
    %v600 = vmax.f32 %v596, 0.0
    %v601 = vmax.f32 %v597, 0.0
    %v602 = vmax.f32 %v598, 0.0
    %v605 = vrot.slane %v599, 1
    %v606 = vrot.slane %v601, 1
    %v611 = vrot.slane %v599, 7
    %v612 = vrot.slane %v600, 7
    %v613 = vsel %vm114, %v611, %v612
    %v614 = vrot.slane %v601, 7
    %v615 = vrot.slane %v602, 7
    %v616 = vsel %vm114, %v614, %v615
    %v623 = vrot.slane %v600, 5
    %v624 = vrot.slane %v602, 5
    %v627 = vsel %vm114, %v605, %v611
    %v628 = vsel %vm114, %v606, %v614
    %v629 = vsel %vm114, %v612, %v623
    %v630 = vsel %vm114, %v615, %v624
    %v635 = vrot.slane %v627, 1
    %v636 = vrot.slane %v613, 1
    %v637 = vsel %vm139, %v635, %v636
    %v638 = vrot.slane %v629, 1
    %v639 = vsel %vm139, %v636, %v638
    %v640 = vrot.slane %v628, 1
    %v641 = vrot.slane %v616, 1
    %v642 = vsel %vm139, %v640, %v641
    %v643 = vrot.slane %v630, 1
    %v644 = vsel %vm139, %v641, %v643
    %v649 = vrot.slane %v627, 2
    %v650 = vrot.slane %v613, 2
    %v651 = vsel %vm154, %v649, %v650
    %v652 = vrot.slane %v629, 2
    %v653 = vsel %vm154, %v650, %v652
    %v654 = vrot.slane %v628, 2
    %v655 = vrot.slane %v616, 2
    %v656 = vsel %vm154, %v654, %v655
    %v657 = vrot.slane %v630, 2
    %v658 = vsel %vm154, %v655, %v657
    %v663 = vpack.c.bf16 %v613, %v627
    %v664 = vpack.c.bf16 %v639, %v637
    %v665 = vpack.c.bf16 %v653, %v651
    %v666 = vpack.c.bf16 %v616, %v628
    %v667 = vpack.c.bf16 %v644, %v642
    %v668 = vpack.c.bf16 %v658, %v656
    %v669 = vld [vmem:[#allocation7] sm:$0xf]
    %v670 = vld [vmem:[#allocation7 + $0x4] sm:$0xf]
    %v671 = vld [vmem:[#allocation7 + $0x8] sm:$0xf]
    %v672 = vld [vmem:[#allocation7 + $0xc] sm:$0xf]
    %v673 = vld [vmem:[#allocation7 + $0x10] sm:$0xf]
    %v674 = vld [vmem:[#allocation7 + $0x14] sm:$0xf]
    %v675 = vld [vmem:[#allocation7 + $0x18] sm:$0xf]
    %v676 = vld [vmem:[#allocation7 + $0x1c] sm:$0xf]
    %v677 = vld [vmem:[#allocation7 + $0x20] sm:$0xf]
    %v678 = vld [vmem:[#allocation7 + $0x24] sm:$0xf]
    %v679 = vld [vmem:[#allocation7 + $0x28] sm:$0xf]
    %v680 = vld [vmem:[#allocation7 + $0x2c] sm:$0xf]
    %v681 = vld [vmem:[#allocation7 + $0x30] sm:$0xf]
    %v682 = vld [vmem:[#allocation7 + $0x34] sm:$0xf]
    %v683 = vld [vmem:[#allocation7 + $0x38] sm:$0xf]
    %v684 = vld [vmem:[#allocation7 + $0x3c] sm:$0xf]
    %v685 = vld [vmem:[#allocation7 + $0x40] sm:$0xf]
    %v686 = vld [vmem:[#allocation7 + $0x44] sm:$0xf]
    %v687 = vld [vmem:[#allocation7 + $0x48] sm:$0xf]
    %v688 = vld [vmem:[#allocation7 + $0x4c] sm:$0xf]
    %v689 = vld [vmem:[#allocation7 + $0x50] sm:$0xf]
    %v690 = vld [vmem:[#allocation7 + $0x54] sm:$0xf]
    %v691 = vld [vmem:[#allocation7 + $0x58] sm:$0xf]
    %v692 = vld [vmem:[#allocation7 + $0x5c] sm:$0xf]
    %v693 = vld [vmem:[#allocation7 + $0x60] sm:$0xf]
    %v694 = vld [vmem:[#allocation7 + $0x64] sm:$0xf]
    %v695 = vld [vmem:[#allocation7 + $0x68] sm:$0xf]
    %v696 = vld [vmem:[#allocation7 + $0x6c] sm:$0xf]
    %v697 = vld [vmem:[#allocation7 + $0x70] sm:$0xf]
    %v698 = vld [vmem:[#allocation7 + $0x74] sm:$0xf]
    %v699 = vld [vmem:[#allocation7 + $0x78] sm:$0xf]
    %v700 = vld [vmem:[#allocation7 + $0x7c] sm:$0xf]
    %v701 = vld [vmem:[#allocation7 + $0x80] sm:$0xf]
    %v702 = vld [vmem:[#allocation7 + $0x84] sm:$0xf]
    %v703 = vld [vmem:[#allocation7 + $0x88] sm:$0xf]
    %v704 = vld [vmem:[#allocation7 + $0x8c] sm:$0xf]
    %v705 = vld [vmem:[#allocation7 + $0x90] sm:$0xf]
    %v706 = vld [vmem:[#allocation7 + $0x94] sm:$0xf]
    %v707 = vld [vmem:[#allocation7 + $0x98] sm:$0xf]
    %v708 = vld [vmem:[#allocation7 + $0x9c] sm:$0xf]
    %v709 = vld [vmem:[#allocation7 + $0xa0] sm:$0xf]
    %v710 = vld [vmem:[#allocation7 + $0xa4] sm:$0xf]
    %v711 = vld [vmem:[#allocation7 + $0xa8] sm:$0xf]
    %v712 = vld [vmem:[#allocation7 + $0xac] sm:$0xf]
    %v713 = vld [vmem:[#allocation7 + $0xb0] sm:$0xf]
    %v714 = vld [vmem:[#allocation7 + $0xb4] sm:$0xf]
    %v715 = vld [vmem:[#allocation7 + $0xb8] sm:$0xf]
    %v716 = vld [vmem:[#allocation7 + $0xbc] sm:$0xf]
    %v765 = vunpack.c.l.b16 %v669
    %v766 = vunpack.c.l.b16 %v670
    %v767 = vunpack.c.l.b16 %v671
    %v768 = vunpack.c.l.b16 %v672
    %v769 = vunpack.c.l.b16 %v673
    %v770 = vunpack.c.l.b16 %v674
    %v771 = vunpack.c.l.b16 %v675
    %v772 = vunpack.c.l.b16 %v676
    %v773 = vunpack.c.l.b16 %v677
    %v774 = vunpack.c.l.b16 %v678
    %v775 = vunpack.c.l.b16 %v679
    %v776 = vunpack.c.l.b16 %v680
    %v777 = vunpack.c.l.b16 %v681
    %v778 = vunpack.c.l.b16 %v682
    %v779 = vunpack.c.l.b16 %v683
    %v780 = vunpack.c.l.b16 %v684
    %v781 = vunpack.c.l.b16 %v685
    %v782 = vunpack.c.l.b16 %v686
    %v783 = vunpack.c.l.b16 %v687
    %v784 = vunpack.c.l.b16 %v688
    %v785 = vunpack.c.l.b16 %v689
    %v786 = vunpack.c.l.b16 %v690
    %v787 = vunpack.c.l.b16 %v691
    %v788 = vunpack.c.l.b16 %v692
    %v789 = vunpack.c.l.b16 %v693
    %v790 = vunpack.c.l.b16 %v694
    %v791 = vunpack.c.l.b16 %v695
    %v792 = vunpack.c.l.b16 %v696
    %v793 = vunpack.c.l.b16 %v697
    %v794 = vunpack.c.l.b16 %v698
    %v795 = vunpack.c.l.b16 %v699
    %v796 = vunpack.c.l.b16 %v700
    %v797 = vunpack.c.l.b16 %v701
    %v798 = vunpack.c.l.b16 %v702
    %v799 = vunpack.c.l.b16 %v703
    %v800 = vunpack.c.l.b16 %v704
    %v801 = vunpack.c.l.b16 %v705
    %v802 = vunpack.c.l.b16 %v706
    %v803 = vunpack.c.l.b16 %v707
    %v804 = vunpack.c.l.b16 %v708
    %v805 = vunpack.c.l.b16 %v709
    %v806 = vunpack.c.l.b16 %v710
    %v807 = vunpack.c.l.b16 %v711
    %v808 = vunpack.c.l.b16 %v712
    %v809 = vunpack.c.l.b16 %v713
    %v810 = vunpack.c.l.b16 %v714
    %v811 = vunpack.c.l.b16 %v715
    %v812 = vunpack.c.l.b16 %v716
    %v813 = vpack.c.b16 %v766, %v765
    %v814 = vpack.c.b16 %v768, %v767
    %v815 = vpack.c.b16 %v770, %v769
    %v816 = vpack.c.b16 %v772, %v771
    %v817 = vpack.c.b16 %v774, %v773
    %v818 = vpack.c.b16 %v776, %v775
    %v819 = vpack.c.b16 %v778, %v777
    %v820 = vpack.c.b16 %v780, %v779
    %v821 = vpack.c.b16 %v782, %v781
    %v822 = vpack.c.b16 %v784, %v783
    %v823 = vpack.c.b16 %v786, %v785
    %v824 = vpack.c.b16 %v788, %v787
    %v825 = vpack.c.b16 %v790, %v789
    %v826 = vpack.c.b16 %v792, %v791
    %v827 = vpack.c.b16 %v794, %v793
    %v828 = vpack.c.b16 %v796, %v795
    %v829 = vpack.c.b16 %v798, %v797
    %v830 = vpack.c.b16 %v800, %v799
    %v831 = vpack.c.b16 %v802, %v801
    %v832 = vpack.c.b16 %v804, %v803
    %v833 = vpack.c.b16 %v806, %v805
    %v834 = vpack.c.b16 %v808, %v807
    %v835 = vpack.c.b16 %v810, %v809
    %v836 = vpack.c.b16 %v812, %v811
    %861 = vmatprep.subr.bf16.mxu0 0
    %862 = vmatpush1.bf16.msra.mxu0 %v820
    %863 = vmatprep.subr.bf16.mxu0 0
    %864 = vmatpush1.bf16.msra.mxu0 %v819
    %865 = vmatprep.subr.bf16.mxu0 0
    %866 = vmatpush1.bf16.msra.mxu0 %v818
    %867 = vmatprep.subr.bf16.mxu0 0
    %868 = vmatpush1.bf16.msra.mxu0 %v817
    %869 = vmatprep.subr.bf16.mxu0 0
    %870 = vmatpush1.bf16.msra.mxu0 %v816
    %871 = vmatprep.subr.bf16.mxu0 0
    %872 = vmatpush1.bf16.msra.mxu0 %v815
    %873 = vmatprep.subr.bf16.mxu0 0
    %874 = vmatpush1.bf16.msra.mxu0 %v814
    %875 = vmatprep.subr.bf16.mxu0 0
    %876 = vmatpush1.bf16.msra.mxu0 %v813
    %877 = vmatprep.subr.bf16.mxu0 0
    %878 = vmatpush2.bf16.msra.mxu0 %v828
    %879 = vmatprep.subr.bf16.mxu0 0
    %880 = vmatpush2.bf16.msra.mxu0 %v827
    %881 = vmatprep.subr.bf16.mxu0 0
    %882 = vmatpush2.bf16.msra.mxu0 %v826
    %883 = vmatprep.subr.bf16.mxu0 0
    %884 = vmatpush2.bf16.msra.mxu0 %v825
    %885 = vmatprep.subr.bf16.mxu0 0
    %886 = vmatpush2.bf16.msra.mxu0 %v824
    %887 = vmatprep.subr.bf16.mxu0 0
    %888 = vmatpush2.bf16.msra.mxu0 %v823
    %889 = vmatprep.subr.bf16.mxu0 0
    %890 = vmatpush2.bf16.msra.mxu0 %v822
    %891 = vmatprep.subr.bf16.mxu0 0
    %892 = vmatpush2.bf16.msra.mxu0 %v821
    %893 = vmatprep.mubr.bf16.mxu0 %v664
    %894 = vmatmul.mubr.bf16.gmra.mxu0 %v663
    %v895 = vpop.f32.mrf.mxu0
    %v896 = vadd.f32 0.0, %v895
    %v897 = vpop.f32.mrf.mxu0
    %v898 = vpop.f32.mrf.mxu0
    %v899 = vadd.f32 0.0, %v898
    %v900 = vpop.f32.mrf.mxu0
    %901 = vmatprep.mubr.bf16.mxu0 %v667
    %902 = vmatmul.mubr.bf16.gmra.mxu0 %v666
    %v903 = vpop.f32.mrf.mxu0
    %v904 = vadd.f32 0.0, %v903
    %v905 = vpop.f32.mrf.mxu0
    %v906 = vpop.f32.mrf.mxu0
    %v907 = vadd.f32 0.0, %v906
    %v908 = vpop.f32.mrf.mxu0
    %909 = vdwg.mxu0
    %910 = vmatprep.subr.bf16.mxu0 0
    %911 = vmatpush1.bf16.msra.mxu0 %v836
    %912 = vmatprep.subr.bf16.mxu0 0
    %913 = vmatpush1.bf16.msra.mxu0 %v835
    %914 = vmatprep.subr.bf16.mxu0 0
    %915 = vmatpush1.bf16.msra.mxu0 %v834
    %916 = vmatprep.subr.bf16.mxu0 0
    %917 = vmatpush1.bf16.msra.mxu0 %v833
    %918 = vmatprep.subr.bf16.mxu0 0
    %919 = vmatpush1.bf16.msra.mxu0 %v832
    %920 = vmatprep.subr.bf16.mxu0 0
    %921 = vmatpush1.bf16.msra.mxu0 %v831
    %922 = vmatprep.subr.bf16.mxu0 0
    %923 = vmatpush1.bf16.msra.mxu0 %v830
    %924 = vmatprep.subr.bf16.mxu0 0
    %925 = vmatpush1.bf16.msra.mxu0 %v829
    %926 = vmatprep.subr.bf16.mxu0 0
    %927 = vmatpush2.bf16.msra.mxu0 0
    %928 = vmatprep.subr.bf16.mxu0 0
    %929 = vmatpush2.bf16.msra.mxu0 0
    %930 = vmatprep.subr.bf16.mxu0 0
    %931 = vmatpush2.bf16.msra.mxu0 0
    %932 = vmatprep.subr.bf16.mxu0 0
    %933 = vmatpush2.bf16.msra.mxu0 0
    %934 = vmatprep.subr.bf16.mxu0 0
    %935 = vmatpush2.bf16.msra.mxu0 0
    %936 = vmatprep.subr.bf16.mxu0 0
    %937 = vmatpush2.bf16.msra.mxu0 0
    %938 = vmatprep.subr.bf16.mxu0 0
    %939 = vmatpush2.bf16.msra.mxu0 0
    %940 = vmatprep.subr.bf16.mxu0 0
    %941 = vmatpush2.bf16.msra.mxu0 0
    %942 = vmatprep.mubr.bf16.mxu0 0
    %943 = vmatmul.mubr.bf16.gmra.mxu0 %v665
    %v944 = vpop.f32.mrf.mxu0
    %v945 = vadd.f32 %v896, %v944
    %v946 = vpop.f32.mrf.mxu0
    %v947 = vpop.f32.mrf.mxu0
    %v948 = vadd.f32 %v899, %v947
    %v949 = vpop.f32.mrf.mxu0
    %950 = vmatprep.mubr.bf16.mxu0 0
    %951 = vmatmul.mubr.bf16.gmra.mxu0 %v668
    %v952 = vpop.f32.mrf.mxu0
    %v953 = vadd.f32 %v904, %v952
    %v954 = vpop.f32.mrf.mxu0
    %v955 = vpop.f32.mrf.mxu0
    %v956 = vadd.f32 %v907, %v955
    %v957 = vpop.f32.mrf.mxu0
    %958 = vdwg.mxu0
    %v959 = vadd.f32 %v945, %v948
    %v960 = vadd.f32 %v959, %v953
    %v961 = vadd.f32 %v960, %v956
    %v962 = vrot.slane %v961, 4
    %v963 = vadd.f32 %v961, %v962
    %v964 = vrot.slane %v963, 2
    %v965 = vadd.f32 %v963, %v964
    %v966 = vrot.slane %v965, 1
    %v967 = vadd.f32 %v965, %v966
    %v968 = vmul.f32 %v945, %v945
    %v969 = vmul.f32 %v948, %v948
    %v970 = vmul.f32 %v953, %v953
    %v971 = vmul.f32 %v956, %v956
    %v972 = vadd.f32 %v968, %v969
    %v973 = vadd.f32 %v972, %v970
    %v974 = vadd.f32 %v973, %v971
    %v975 = vrot.slane %v974, 4
    %v976 = vadd.f32 %v974, %v975
    %v977 = vrot.slane %v976, 2
    %v978 = vadd.f32 %v976, %v977
    %v979 = vrot.slane %v978, 1
    %v980 = vadd.f32 %v978, %v979
    %v981 = vsel %vm114, %v967, %v980
    %v982 = vsel %vm488, %v981, 0.0
    %983 = vmatprep.subr.mxu0 0.0
    %984 = vmatpush1.msra.mxu0 %v101
    %985 = vmatprep.subr.mxu0 0.0
    %986 = vmatpush1.msra.mxu0 %v100
    %987 = vmatprep.subr.mxu0 0.0
    %988 = vmatpush1.msra.mxu0 %v99
    %989 = vmatprep.subr.mxu0 0.0
    %990 = vmatpush1.msra.mxu0 %v98
    %991 = vmatprep.subr.mxu0 0.0
    %992 = vmatpush1.msra.mxu0 %v97
    %993 = vmatprep.subr.mxu0 0.0
    %994 = vmatpush1.msra.mxu0 %v96
    %995 = vmatprep.subr.mxu0 0.0
    %996 = vmatpush1.msra.mxu0 %v95
    %997 = vmatprep.subr.mxu0 0.0
    %998 = vmatpush1.msra.mxu0 %v94
    %999 = vmatprep.subr.mxu0 0.0
    %1000 = vmatpush1.msra.mxu0 %v93
    %1001 = vmatprep.subr.mxu0 0.0
    %1002 = vmatpush1.msra.mxu0 %v92
    %1003 = vmatprep.subr.mxu0 0.0
    %1004 = vmatpush1.msra.mxu0 %v91
    %1005 = vmatprep.subr.mxu0 0.0
    %1006 = vmatpush1.msra.mxu0 %v90
    %1007 = vmatprep.subr.mxu0 0.0
    %1008 = vmatpush1.msra.mxu0 %v89
    %1009 = vmatprep.subr.mxu0 0.0
    %1010 = vmatpush1.msra.mxu0 %v88
    %1011 = vmatprep.subr.mxu0 0.0
    %1012 = vmatpush1.msra.mxu0 %v87
    %1013 = vmatprep.subr.mxu0 0.0
    %1014 = vmatpush1.msra.mxu0 %v86
    %1015 = vmatprep.subr.mxu0 0.0
    %1016 = vmatpush2.msra.mxu0 0.0
    %1017 = vmatprep.subr.mxu0 0.0
    %1018 = vmatpush2.msra.mxu0 0.0
    %1019 = vmatprep.subr.mxu0 0.0
    %1020 = vmatpush2.msra.mxu0 0.0
    %1021 = vmatprep.subr.mxu0 0.0
    %1022 = vmatpush2.msra.mxu0 0.0
    %1023 = vmatprep.subr.mxu0 0.0
    %1024 = vmatpush2.msra.mxu0 0.0
    %1025 = vmatprep.subr.mxu0 0.0
    %1026 = vmatpush2.msra.mxu0 0.0
    %1027 = vmatprep.subr.mxu0 0.0
    %1028 = vmatpush2.msra.mxu0 0.0
    %1029 = vmatprep.subr.mxu0 0.0
    %1030 = vmatpush2.msra.mxu0 0.0
    %1031 = vmatprep.subr.mxu0 0.0
    %1032 = vmatpush2.msra.mxu0 0.0
    %1033 = vmatprep.subr.mxu0 0.0
    %1034 = vmatpush2.msra.mxu0 0.0
    %1035 = vmatprep.subr.mxu0 0.0
    %1036 = vmatpush2.msra.mxu0 0.0
    %1037 = vmatprep.subr.mxu0 0.0
    %1038 = vmatpush2.msra.mxu0 0.0
    %1039 = vmatprep.subr.mxu0 0.0
    %1040 = vmatpush2.msra.mxu0 0.0
    %1041 = vmatprep.subr.mxu0 0.0
    %1042 = vmatpush2.msra.mxu0 0.0
    %1043 = vmatprep.subr.mxu0 0.0
    %1044 = vmatpush2.msra.mxu0 0.0
    %1045 = vmatprep.subr.mxu0 0.0
    %1046 = vmatpush2.msra.mxu0 0.0
    %1047 = vmatprep.mubr.f32.mxu0 0.0
    %1048 = vmatmul.mubr.f32.gmra.mxu0 %v982
    %v1049 = vpop.f32.mrf.mxu0
    %v1050 = vadd.f32 0.0, %v1049
    %v1051 = vpop.f32.mrf.mxu0
    %1052 = vdwg.mxu0
    %v1053 = vmul.f32 %v1050, %v1050
    %v1055 = vrot.slane %v1053, 7
    %v1057 = vsub.f32 %v1050, %v1055
    %v1058 = vadd.f32 %v1057, 1e-05
    %v1059 = vrsqrt.pop %v1058
    %v1060 = vld [vmem:[%s5] sm:$0x1]
    %v1062 = vlaneseq
    %v1063 = vshrl.u32 %v1062, 7
    %v1064 = vsub.s32 0, %v1063
    %v1065 = vrot.slane %v1060, %v1064
    %v1067 = vmul.f32 %v1059, %v1065
    %v1068 = vld [vmem:[%s6] sm:$0x1]
    %v1070 = vrot.slane %v1067, 1
    %v1072 = vmul.f32 %v1050, %v1070
    %v1073 = vsub.f32 %v1068, %v1072
    %v1074 = vlaneseq
    %v1075 = vshrl.u32 %v1074, 7
    %v1076 = vsub.s32 1, %v1075
    %v1077 = vrot.slane %v1067, %v1076
    %v1078 = vmul.f32 %v945, %v1077
    %v1079 = vmul.f32 %v948, %v1077
    %v1080 = vmul.f32 %v953, %v1077
    %v1081 = vmul.f32 %v956, %v1077
    %v1083 = vlaneseq
    %v1084 = vshrl.u32 %v1083, 7
    %v1085 = vsub.s32 0, %v1084
    %v1086 = vrot.slane %v1073, %v1085
    %v1088 = vadd.f32 %v1078, %v1086
    %v1089 = vadd.f32 %v1079, %v1086
    %v1090 = vadd.f32 %v1080, %v1086
    %v1091 = vadd.f32 %v1081, %v1086
    %v1092 = vadd.f32 %v1088, %v102
    %v1093 = vadd.f32 %v1089, %v103
    %v1094 = vadd.f32 %v1090, %v104
    %v1095 = vadd.f32 %v1091, %v105
    %1096 = vst [vmem:[#allocation10] sm:$0xff] %v1092
    %1097 = vst [vmem:[#allocation10 + $0x8] sm:$0xff] %v1093
    %1098 = vst [vmem:[#allocation10 + $0x10] sm:$0xff] %v1094
    %1099 = vst [vmem:[#allocation10 + $0x18] sm:$0xff] %v1095
    // Predicated region
    $region50: #{tpu_custom_call.1} parent=1 // pred_check
      _
    $region51: #{tpu_custom_call.1} parent=1 // pred_check_branch
      %1101 = sbr.rel (0) target = $region53
    $region52: #{tpu_custom_call.1} parent=1 // pred_region
      %s1103 = ssub.s32 512, 512
      %1104 = vsyncadd [#allocation4], %s1103
      %s1105 = sshll.u32 [#allocation10], 4
      %s1106 = int_to_ptr.vmem [resolvable:$true] %s1105
      %1111 = dma.vmem_to_hbm [thread:$0]  %s1106, 512, %s8, [#allocation4], 128, 128, 8
    $region53: #{tpu_custom_call.1} parent=1 // pred_fallthru
      _
    // Predicated region
    $region54: #{tpu_custom_call.1} parent=1 // pred_check
      _
    $region55: #{tpu_custom_call.1} parent=1 // pred_check_branch
      %1113 = sbr.rel (0) target = $region57
    $region56: #{tpu_custom_call.1} parent=1 // pred_region
      %1114 = dma.done [#allocation4], 512
    $region57: #{tpu_custom_call.1} parent=1 // pred_fallthru
      _
    %1115 = vsyncpa [#allocation3], 1
    %1116 = vsyncpa [#allocation6], 1
    %1117 = vsyncpa [#allocation9], 1
    %1118 = vsyncpa [#allocation4], 1

</llo_original>
